<compile_context>
chip_gen: v7x
topology: tpu7x:2x2x1
jax: 0.10.0
libtpu: 0.0.40
codegen_flags: <defaults>
</compile_context>

<pallas_src>
import functools

import jax
import jax.numpy as jnp
from jax.experimental import pallas as pl
from jax.experimental.pallas import tpu as pltpu

_LANE = 128


def _round_up(x, m):
    return ((x + m - 1) // m) * m


# ----------------------------------------------------------------------------
# Pallas kernel: one batch tile of the full MLP, feature-major layout.
#   x_ref  : (IN, TB) bf16   lane-dense state tile (batch on the lane axis)
#   w1_ref : (H1, IN) bf16,  b1_ref: (H1, 1) f32
#   w2_ref : (H2, H1) bf16,  b2_ref: (H2, 1) f32
#   w3_ref : (H2, 1)  f32    when scalar_out (VPU path), else (O, H2) bf16
#   b3_ref : (O, 1)   f32
#   o_ref  : (O, TB)  f32    lane-dense output tile
# ----------------------------------------------------------------------------
def _value_mlp_kernel(x_ref, w1_ref, b1_ref, w2_ref, b2_ref, w3_ref, b3_ref,
                      o_ref, *, scalar_out):
    # Layer 1: (H1, IN) @ (IN, TB) -> (H1, TB); MXU, f32 accumulation.
    h = jnp.dot(w1_ref[...], x_ref[...], preferred_element_type=jnp.float32)
    h = jnp.maximum(h + b1_ref[...], 0.0)          # f32 bias-add + ReLU (VPU)

    # Layer 2: (H2, H1) @ (H1, TB) -> (H2, TB).
    h = jnp.dot(w2_ref[...], h.astype(w2_ref.dtype),
                preferred_element_type=jnp.float32)
    h = jnp.maximum(h + b2_ref[...], 0.0)

    if scalar_out:
        # Output layer, out_size == 1: broadcast multiply (VPU) + sublane
        # reduce (XLU) in f32 -- avoids a nearly-empty MXU tile.
        out = jnp.sum(w3_ref[...] * h, axis=0, keepdims=True)
    else:
        # General output layer on the MXU.
        out = jnp.dot(w3_ref[...], h.astype(w3_ref.dtype),
                      preferred_element_type=jnp.float32)
    o_ref[...] = (out + b3_ref[...]).astype(o_ref.dtype)


def prepare_value_params(params_f32):
    """One-time parameter prep (do NOT call per forward): bf16 weight casts,
    f32 biases, and (H2, 1) f32 layout for w3 when out_size == 1."""
    out_size = params_f32["w3"].shape[0]
    prepped = {
        "w1": params_f32["w1"].astype(jnp.bfloat16),
        "b1": params_f32["b1"].astype(jnp.float32),
        "w2": params_f32["w2"].astype(jnp.bfloat16),
        "b2": params_f32["b2"].astype(jnp.float32),
        "b3": params_f32["b3"].astype(jnp.float32),
    }
    if out_size == 1:
        prepped["w3"] = params_f32["w3"].astype(jnp.float32).T   # (H2, 1) f32
    else:
        prepped["w3"] = params_f32["w3"].astype(jnp.bfloat16)    # (O, H2) bf16
    return prepped


def _choose_tile(B, block_rows):
    if B <= _LANE:
        return B                      # single full-array block (tiny batches)
    # Big tile (amortize per-step overhead), multiple of the 128-lane granule,
    # but keep >= 2 grid steps so both v7x TensorCores are used.
    return min(_round_up(block_rows, _LANE),
               _round_up(pl.cdiv(B, 2), _LANE))


def value_network_forward(state, params, *, block_rows=4096):
    """state: [B, input_size] f32.  params: output of prepare_value_params().
    Returns [B, out_size] f32."""
    B, in_size = state.shape
    out_size = params["b3"].shape[0]
    scalar_out = out_size == 1

    # Single fused transpose+cast pass over the state: feature-major bf16.
    xT = state.T.astype(jnp.bfloat16)                      # (IN, B)

    TB = _choose_tile(B, block_rows)
    grid = (pl.cdiv(B, TB),)   # partial last block handled by Pallas masking

    const = lambda i: (0, 0)   # weights/biases: resident blocks, no per-step DMA
    kernel = functools.partial(_value_mlp_kernel, scalar_out=scalar_out)

    out_t = pl.pallas_call(
        kernel,
        out_shape=jax.ShapeDtypeStruct((out_size, B), jnp.float32),
        grid=grid,
        in_specs=[
            pl.BlockSpec((in_size, TB), lambda i: (0, i)),   # state tiles
            pl.BlockSpec(params["w1"].shape, const),
            pl.BlockSpec(params["b1"].shape, const),
            pl.BlockSpec(params["w2"].shape, const),
            pl.BlockSpec(params["b2"].shape, const),
            pl.BlockSpec(params["w3"].shape, const),
            pl.BlockSpec(params["b3"].shape, const),
        ],
        out_specs=pl.BlockSpec((out_size, TB), lambda i: (0, i)),
        compiler_params=pltpu.CompilerParams(
            dimension_semantics=("parallel",)),   # megacore-shard the batch
    )(xT, params["w1"], params["b1"], params["w2"], params["b2"],
      params["w3"], params["b3"])

    if scalar_out:
        # (1, B) row-major order == (B, 1): free reshape, no relayout copy.
        return out_t.reshape(B, 1)
    return out_t.T


# ----------------------------------------------------------------------------
# Deterministic parameter init matching weights_init_:
#   Linear.weight ~ xavier_uniform, Linear.bias = 0.1
# ----------------------------------------------------------------------------
def _xavier_uniform(key, fan_in, fan_out):
    limit = jnp.sqrt(6.0 / (fan_in + fan_out))
    # PyTorch Linear.weight layout: [out_features, in_features].
    return jax.random.uniform(key, (fan_out, fan_in), jnp.float32,
                              minval=-limit, maxval=limit)


def init_value_network(key, hidden_sizes, output_size, input_size):
    assert len(hidden_sizes) == 2, "kernel is specialized to 2 hidden layers"
    h1, h2 = hidden_sizes
    k1, k2, k3 = jax.random.split(key, 3)
    return {
        "w1": _xavier_uniform(k1, input_size, h1),
        "b1": jnp.full((h1, 1), 0.1, jnp.float32),
        "w2": _xavier_uniform(k2, h1, h2),
        "b2": jnp.full((h2, 1), 0.1, jnp.float32),
        "w3": _xavier_uniform(k3, h2, output_size),
        "b3": jnp.full((output_size, 1), 0.1, jnp.float32),
    }


# Pure-JAX reference mirroring the kernel's numerics:
# bf16 operands + f32 accumulation for the hidden layers, f32 output layer
# when out_size == 1.
def _reference_forward(state, p_f32):
    def lin_bf16(a, w, b):
        y = jnp.dot(a.astype(jnp.bfloat16), w.T.astype(jnp.bfloat16),
                    preferred_element_type=jnp.float32)
        return y + b.T
    h = jnp.maximum(lin_bf16(state, p_f32["w1"], p_f32["b1"]), 0.0)
    h = jnp.maximum(lin_bf16(h, p_f32["w2"], p_f32["b2"]), 0.0)
    if p_f32["w3"].shape[0] == 1:
        return jnp.dot(h, p_f32["w3"].T) + p_f32["b3"].T     # f32 output layer
    return lin_bf16(h, p_f32["w3"], p_f32["b3"])


if __name__ == "__main__":
    key = jax.random.PRNGKey(0)
    k_param, k_state = jax.random.split(key)

    # ValueNetwork(hidden_sizes=(32, 32), output_size=1, input_size=16)
    input_size, hidden_sizes, output_size = 16, (32, 32), 1
    params_f32 = init_value_network(k_param, hidden_sizes, output_size,
                                    input_size)
    params = prepare_value_params(params_f32)   # one-time bf16 cast / layout

    # (a) Tiled path: B=200 > 128 -> TB=128, grid of 2 steps with a masked
    #     partial last block (no jnp.pad), feature-major lane-dense tiles.
    batch = 200
    state = jax.random.normal(k_state, (batch, input_size), jnp.float32)
    out = jax.block_until_ready(value_network_forward(state, params))
    ref = _reference_forward(state, params_f32)
    assert out.shape == (batch, output_size)
    assert jnp.allclose(out, ref, atol=1e-3, rtol=1e-3), "mismatch (tiled)"

    # (b) Tiny-batch path: single full-array block.
    small = state[:4]
    out_s = jax.block_until_ready(value_network_forward(small, params))
    assert out_s.shape == (4, output_size)
    assert jnp.allclose(out_s, ref[:4], atol=1e-3, rtol=1e-3), "mismatch (small)"

    print("KERNEL_OK")
</pallas_src>

<mosaic_0001>
module attributes {stable_mosaic.version = 11 : i64} {
  func.func @_value_mlp_kernel(%arg0: i32, %arg1: memref<16x128xbf16, #tpu.memory_space<vmem>>, %arg2: memref<32x16xbf16, #tpu.memory_space<vmem>>, %arg3: memref<32x1xf32, #tpu.memory_space<vmem>>, %arg4: memref<32x32xbf16, #tpu.memory_space<vmem>>, %arg5: memref<32x1xf32, #tpu.memory_space<vmem>>, %arg6: memref<32x1xf32, #tpu.memory_space<vmem>>, %arg7: memref<1x1xf32, #tpu.memory_space<vmem>>, %arg8: memref<1x128xf32, #tpu.memory_space<vmem>>) attributes {dimension_semantics = [#tpu.dimension_semantics<parallel>], iteration_bounds = array<i64: 2>, scalar_prefetch = 0 : i64, scratch_operands = 0 : i64, tpu.core_type = #tpu.core_type<tc>, window_params = [{transform_indices = @transform_0, window_bounds = array<i64: 16, 128>}, {pipeline_mode = #tpu.pipeline_mode<synchronous>, transform_indices = @transform_1, window_bounds = array<i64: 32, 16>}, {pipeline_mode = #tpu.pipeline_mode<synchronous>, transform_indices = @transform_2, window_bounds = array<i64: 32, 1>}, {pipeline_mode = #tpu.pipeline_mode<synchronous>, transform_indices = @transform_3, window_bounds = array<i64: 32, 32>}, {pipeline_mode = #tpu.pipeline_mode<synchronous>, transform_indices = @transform_4, window_bounds = array<i64: 32, 1>}, {pipeline_mode = #tpu.pipeline_mode<synchronous>, transform_indices = @transform_5, window_bounds = array<i64: 32, 1>}, {pipeline_mode = #tpu.pipeline_mode<synchronous>, transform_indices = @transform_6, window_bounds = array<i64: 1, 1>}, {transform_indices = @transform_7, window_bounds = array<i64: 1, 128>}]} {
    %c0 = arith.constant 0 : index
    %c0_0 = arith.constant 0 : index
    %0 = vector.load %arg2[%c0, %c0_0] : memref<32x16xbf16, #tpu.memory_space<vmem>>, vector<32x16xbf16>
    %c0_1 = arith.constant 0 : index
    %c0_2 = arith.constant 0 : index
    %1 = vector.load %arg1[%c0_1, %c0_2] : memref<16x128xbf16, #tpu.memory_space<vmem>>, vector<16x128xbf16>
    %cst = arith.constant dense<0.000000e+00> : vector<32x128xf32>
    %2 = tpu.matmul %0, %1, %cst {dimension_numbers = #tpu.dot_dimension_numbers<[1], [0], [0], [1], [0, 0, 1, 1], [], []>} : vector<32x16xbf16>, vector<16x128xbf16>, vector<32x128xf32> -> vector<32x128xf32>
    %c0_3 = arith.constant 0 : index
    %c0_4 = arith.constant 0 : index
    %3 = vector.load %arg3[%c0_3, %c0_4] : memref<32x1xf32, #tpu.memory_space<vmem>>, vector<32x1xf32>
    %4 = vector.broadcast %3 : vector<32x1xf32> to vector<32x128xf32>
    %5 = arith.addf %2, %4 : vector<32x128xf32>
    %cst_5 = arith.constant 0.000000e+00 : f32
    %6 = vector.broadcast %cst_5 : f32 to vector<32x128xf32>
    %7 = arith.maximumf %5, %6 : vector<32x128xf32>
    %c0_6 = arith.constant 0 : index
    %c0_7 = arith.constant 0 : index
    %8 = vector.load %arg4[%c0_6, %c0_7] : memref<32x32xbf16, #tpu.memory_space<vmem>>, vector<32x32xbf16>
    %9 = arith.truncf %7 : vector<32x128xf32> to vector<32x128xbf16>
    %cst_8 = arith.constant dense<0.000000e+00> : vector<32x128xf32>
    %10 = tpu.matmul %8, %9, %cst_8 {dimension_numbers = #tpu.dot_dimension_numbers<[1], [0], [0], [1], [0, 0, 1, 1], [], []>} : vector<32x32xbf16>, vector<32x128xbf16>, vector<32x128xf32> -> vector<32x128xf32>
    %c0_9 = arith.constant 0 : index
    %c0_10 = arith.constant 0 : index
    %11 = vector.load %arg5[%c0_9, %c0_10] : memref<32x1xf32, #tpu.memory_space<vmem>>, vector<32x1xf32>
    %12 = vector.broadcast %11 : vector<32x1xf32> to vector<32x128xf32>
    %13 = arith.addf %10, %12 : vector<32x128xf32>
    %cst_11 = arith.constant 0.000000e+00 : f32
    %14 = vector.broadcast %cst_11 : f32 to vector<32x128xf32>
    %15 = arith.maximumf %13, %14 : vector<32x128xf32>
    %c0_12 = arith.constant 0 : index
    %c0_13 = arith.constant 0 : index
    %16 = vector.load %arg6[%c0_12, %c0_13] : memref<32x1xf32, #tpu.memory_space<vmem>>, vector<32x1xf32>
    %17 = vector.broadcast %16 : vector<32x1xf32> to vector<32x128xf32>
    %18 = arith.mulf %17, %15 : vector<32x128xf32>
    %cst_14 = arith.constant dense<0.000000e+00> : vector<128xf32>
    %19 = vector.multi_reduction <add>, %18, %cst_14 [0] : vector<32x128xf32> to vector<128xf32>
    %20 = vector.shape_cast %19 : vector<128xf32> to vector<1x128xf32>
    %c0_15 = arith.constant 0 : index
    %c0_16 = arith.constant 0 : index
    %21 = vector.load %arg7[%c0_15, %c0_16] : memref<1x1xf32, #tpu.memory_space<vmem>>, vector<1x1xf32>
    %22 = vector.broadcast %21 : vector<1x1xf32> to vector<1x128xf32>
    %23 = arith.addf %20, %22 : vector<1x128xf32>
    %c0_17 = arith.constant 0 : index
    %c0_18 = arith.constant 0 : index
    %24 = vector.load %arg8[%c0_17, %c0_18] : memref<1x128xf32, #tpu.memory_space<vmem>>, vector<1x128xf32>
    tpu.vector_store %arg8[%c0_17, %c0_18], %23 {strides = array<i32>} : memref<1x128xf32, #tpu.memory_space<vmem>>, vector<1x128xf32>,
    return
  }
  func.func @transform_0(%arg0: i32) -> (i32, i32) {
    %c0_i32 = arith.constant 0 : i32
    %c0_i32_0 = arith.constant 0 : i32
    return %c0_i32, %arg0 : i32, i32
  }
  func.func @transform_1(%arg0: i32) -> (i32, i32) {
    %c0_i32 = arith.constant 0 : i32
    %c0_i32_0 = arith.constant 0 : i32
    %c0_i32_1 = arith.constant 0 : i32
    return %c0_i32, %c0_i32_0 : i32, i32
  }
  func.func @transform_2(%arg0: i32) -> (i32, i32) {
    %c0_i32 = arith.constant 0 : i32
    %c0_i32_0 = arith.constant 0 : i32
    %c0_i32_1 = arith.constant 0 : i32
    return %c0_i32, %c0_i32_0 : i32, i32
  }
  func.func @transform_3(%arg0: i32) -> (i32, i32) {
    %c0_i32 = arith.constant 0 : i32
    %c0_i32_0 = arith.constant 0 : i32
    %c0_i32_1 = arith.constant 0 : i32
    return %c0_i32, %c0_i32_0 : i32, i32
  }
  func.func @transform_4(%arg0: i32) -> (i32, i32) {
    %c0_i32 = arith.constant 0 : i32
    %c0_i32_0 = arith.constant 0 : i32
    %c0_i32_1 = arith.constant 0 : i32
    return %c0_i32, %c0_i32_0 : i32, i32
  }
  func.func @transform_5(%arg0: i32) -> (i32, i32) {
    %c0_i32 = arith.constant 0 : i32
    %c0_i32_0 = arith.constant 0 : i32
    %c0_i32_1 = arith.constant 0 : i32
    return %c0_i32, %c0_i32_0 : i32, i32
  }
  func.func @transform_6(%arg0: i32) -> (i32, i32) {
    %c0_i32 = arith.constant 0 : i32
    %c0_i32_0 = arith.constant 0 : i32
    %c0_i32_1 = arith.constant 0 : i32
    return %c0_i32, %c0_i32_0 : i32, i32
  }
  func.func @transform_7(%arg0: i32) -> (i32, i32) {
    %c0_i32 = arith.constant 0 : i32
    %c0_i32_0 = arith.constant 0 : i32
    return %c0_i32, %arg0 : i32, i32
  }
}

</mosaic_0001>

<llo_original>
// kernel: tpu_custom_call.1
$region0: #{tpu_custom_call.1}
  #allocation0 [shape = 'u32[]', space=smem, size = 0x4, offset = 0x4, fixed_abs, tag = 'smem constant byte address 0x4 - core index']
  #allocation1 [shape = 'u32[144,128]{1,0:T(1,128)}', space=vmem, size = 0x12000, scoped, tag = 'internal scratch']
  #allocation2 [shape = 'f32[1,1]{1,0:T(1,128)S(1)}', space=vmem, size = 0x200, scoped, tag = 'scoped memory for tpu_custom_call.1']
  %s0 = inlined_call_operand.vmem [shape: bf16[16,200], index: 0, kind: input, shape index: {}]
  %s1 = inlined_call_operand.vmem [shape: bf16[32,16], index: 1, kind: input, shape index: {}]
  %s2 = inlined_call_operand.vmem [shape: f32[32,1], index: 2, kind: input, shape index: {}]
  %s3 = inlined_call_operand.vmem [shape: bf16[32,32], index: 3, kind: input, shape index: {}]
  %s4 = inlined_call_operand.vmem [shape: f32[32,1], index: 4, kind: input, shape index: {}]
  %s5 = inlined_call_operand.vmem [shape: f32[32,1], index: 5, kind: input, shape index: {}]
  %s6 = inlined_call_operand.<no memory space> [shape: f32[1,1], index: 6, kind: input, shape index: {}]
  %s7 = inlined_call_operand.hbm [shape: f32[1,200], index: 7, kind: output, shape index: {}]
  %s8 = sld [smem:[#allocation0]]
  $region102: #{tpu_custom_call.1} parent=0
    _
  %s10 = ssub.s32 1, %s8
  %s11 = scalar_select 0, %s10, %s8
  %v12 = vstv %s6
  %13 = vst [vmem:[#allocation2] sm:$0x1] %v12
  $region1: #{tpu_custom_call.1} parent=0
    #allocation3 [shape = 'u8[8192]{0}', space=vmem, size = 0x2000, scoped, tag = 'input window, operand 0']
    #allocation4 [shape = 'u8[1024]{0}', space=vmem, size = 0x400, scoped, tag = 'output window, operand 0']
    #allocation5 [shape = 's32[2]{0}', space=sflag, size = 0x8, scoped, tag = 'scoped memory for tpu_custom_call.1']
    %14 = vsyncpa [#allocation5], 0
    %s15 = scalar_lea.sflag [#allocation5], 1
    %16 = vsyncpa %s15, 0
    loop: start=0, step=1, limit=4
    $region2: #{tpu_custom_call.1} parent=1 // loop_pre_header
      _
    $region3: #{tpu_custom_call.1} parent=1 // loop_header
      %s18 = sphi 0, %s22
      %p19 = scmp.ge.s32.totalorder %s18, 4
      %s28 = sphi 0, %s30
      %s31 = sphi 0, %s28
      %s32 = sphi 0, %s31
      %s48 = sphi 0, %s32
      %s52 = sphi 0, %s52
      %s54 = sphi 0, %s52
      %s55 = sphi 0, %s54
      %s69 = sphi 0, %s55
      %s73 = sphi 0, %s73
      %s75 = sphi 0, %s73
      %s76 = sphi 0, %s75
      %s90 = sphi 0, %s76
      %s94 = sphi 0, %s94
      %s96 = sphi 0, %s94
      %s97 = sphi 0, %s96
      %s111 = sphi 0, %s97
      %s115 = sphi 0, %s115
      %s117 = sphi 0, %s115
      %s118 = sphi 0, %s117
      %s132 = sphi 0, %s118
      %s136 = sphi 0, %s136
      %s138 = sphi 0, %s136
      %s139 = sphi 0, %s138
      %s153 = sphi 0, %s139
      %s157 = sphi 0, %s157
      %s159 = sphi 0, %s157
      %s160 = sphi 0, %s159
      %s174 = sphi 0, %s160
      %s180 = sphi 0, %s182
      %s183 = sphi 0, %s180
      %s184 = sphi 0, %s183
      %s200 = sphi 0, %s184
    $region4: #{tpu_custom_call.1} parent=1 // loop_header_branch
      %21 = sbr.rel (%p19) target = $region8
    $region5: #{tpu_custom_call.1} parent=1 // loop_body
      %s23 = ssub.s32 %s18, 1
      %s24 = ssub.s32 %s18, 2
      %s25 = sadd.s32 %s18, 1
      %s26 = ssub.s32 %s18, %s25
      %p27 = scmp.eq.s32.totalorder %s26, 0
      %s29 = sadd.s32 %s28, 1
      %s30 = scalar_select %p27, %s28, %s29
      %p33 = pneg %p27
      %p34 = scmp.eq.s32.totalorder %s18, 1
      %p35 = por %p33, %p34
      %p36 = scmp.ne.s32.totalorder %s28, %s31
      %p37 = scmp.eq.s32.totalorder %s18, 0
      %p38 = por %p36, %p37
      %p39 = scmp.ne.s32.totalorder %s28, %s31
      %p40 = scmp.eq.s32.totalorder %s23, 1
      %p41 = por %p39, %p40
      %p42 = scmp.ne.s32.totalorder %s31, %s32
      %p43 = scmp.eq.s32.totalorder %s23, 0
      %p44 = por %p42, %p43
      %p45 = scmp.ne.s32.totalorder %s31, %s32
      %p46 = scmp.eq.s32.totalorder %s24, 1
      %p47 = por %p45, %p46
      %p49 = scmp.ne.s32.totalorder %s32, %s48
      %p50 = scmp.eq.s32.totalorder %s24, 0
      %p51 = por %p49, %p50
      %s53 = sadd.s32 %s52, 1
      %p56 = scmp.eq.s32.totalorder %s18, 1
      %p57 = scmp.ne.s32.totalorder %s52, %s54
      %p58 = scmp.eq.s32.totalorder %s18, 0
      %p59 = por %p57, %p58
      %p60 = scmp.ne.s32.totalorder %s52, %s54
      %p61 = scmp.eq.s32.totalorder %s23, 1
      %p62 = por %p60, %p61
      %p63 = scmp.ne.s32.totalorder %s54, %s55
      %p64 = scmp.eq.s32.totalorder %s23, 0
      %p65 = por %p63, %p64
      %p66 = scmp.ne.s32.totalorder %s54, %s55
      %p67 = scmp.eq.s32.totalorder %s24, 1
      %p68 = por %p66, %p67
      %p70 = scmp.ne.s32.totalorder %s55, %s69
      %p71 = scmp.eq.s32.totalorder %s24, 0
      %p72 = por %p70, %p71
      %s74 = sadd.s32 %s73, 1
      %p77 = scmp.eq.s32.totalorder %s18, 1
      %p78 = scmp.ne.s32.totalorder %s73, %s75
      %p79 = scmp.eq.s32.totalorder %s18, 0
      %p80 = por %p78, %p79
      %p81 = scmp.ne.s32.totalorder %s73, %s75
      %p82 = scmp.eq.s32.totalorder %s23, 1
      %p83 = por %p81, %p82
      %p84 = scmp.ne.s32.totalorder %s75, %s76
      %p85 = scmp.eq.s32.totalorder %s23, 0
      %p86 = por %p84, %p85
      %p87 = scmp.ne.s32.totalorder %s75, %s76
      %p88 = scmp.eq.s32.totalorder %s24, 1
      %p89 = por %p87, %p88
      %p91 = scmp.ne.s32.totalorder %s76, %s90
      %p92 = scmp.eq.s32.totalorder %s24, 0
      %p93 = por %p91, %p92
      %s95 = sadd.s32 %s94, 1
      %p98 = scmp.eq.s32.totalorder %s18, 1
      %p99 = scmp.ne.s32.totalorder %s94, %s96
      %p100 = scmp.eq.s32.totalorder %s18, 0
      %p101 = por %p99, %p100
      %p102 = scmp.ne.s32.totalorder %s94, %s96
      %p103 = scmp.eq.s32.totalorder %s23, 1
      %p104 = por %p102, %p103
      %p105 = scmp.ne.s32.totalorder %s96, %s97
      %p106 = scmp.eq.s32.totalorder %s23, 0
      %p107 = por %p105, %p106
      %p108 = scmp.ne.s32.totalorder %s96, %s97
      %p109 = scmp.eq.s32.totalorder %s24, 1
      %p110 = por %p108, %p109
      %p112 = scmp.ne.s32.totalorder %s97, %s111
      %p113 = scmp.eq.s32.totalorder %s24, 0
      %p114 = por %p112, %p113
      %s116 = sadd.s32 %s115, 1
      %p119 = scmp.eq.s32.totalorder %s18, 1
      %p120 = scmp.ne.s32.totalorder %s115, %s117
      %p121 = scmp.eq.s32.totalorder %s18, 0
      %p122 = por %p120, %p121
      %p123 = scmp.ne.s32.totalorder %s115, %s117
      %p124 = scmp.eq.s32.totalorder %s23, 1
      %p125 = por %p123, %p124
      %p126 = scmp.ne.s32.totalorder %s117, %s118
      %p127 = scmp.eq.s32.totalorder %s23, 0
      %p128 = por %p126, %p127
      %p129 = scmp.ne.s32.totalorder %s117, %s118
      %p130 = scmp.eq.s32.totalorder %s24, 1
      %p131 = por %p129, %p130
      %p133 = scmp.ne.s32.totalorder %s118, %s132
      %p134 = scmp.eq.s32.totalorder %s24, 0
      %p135 = por %p133, %p134
      %s137 = sadd.s32 %s136, 1
      %p140 = scmp.eq.s32.totalorder %s18, 1
      %p141 = scmp.ne.s32.totalorder %s136, %s138
      %p142 = scmp.eq.s32.totalorder %s18, 0
      %p143 = por %p141, %p142
      %p144 = scmp.ne.s32.totalorder %s136, %s138
      %p145 = scmp.eq.s32.totalorder %s23, 1
      %p146 = por %p144, %p145
      %p147 = scmp.ne.s32.totalorder %s138, %s139
      %p148 = scmp.eq.s32.totalorder %s23, 0
      %p149 = por %p147, %p148
      %p150 = scmp.ne.s32.totalorder %s138, %s139
      %p151 = scmp.eq.s32.totalorder %s24, 1
      %p152 = por %p150, %p151
      %p154 = scmp.ne.s32.totalorder %s139, %s153
      %p155 = scmp.eq.s32.totalorder %s24, 0
      %p156 = por %p154, %p155
      %s158 = sadd.s32 %s157, 1
      %p161 = scmp.eq.s32.totalorder %s18, 1
      %p162 = scmp.ne.s32.totalorder %s157, %s159
      %p163 = scmp.eq.s32.totalorder %s18, 0
      %p164 = por %p162, %p163
      %p165 = scmp.ne.s32.totalorder %s157, %s159
      %p166 = scmp.eq.s32.totalorder %s23, 1
      %p167 = por %p165, %p166
      %p168 = scmp.ne.s32.totalorder %s159, %s160
      %p169 = scmp.eq.s32.totalorder %s23, 0
      %p170 = por %p168, %p169
      %p171 = scmp.ne.s32.totalorder %s159, %s160
      %p172 = scmp.eq.s32.totalorder %s24, 1
      %p173 = por %p171, %p172
      %p175 = scmp.ne.s32.totalorder %s160, %s174
      %p176 = scmp.eq.s32.totalorder %s24, 0
      %p177 = por %p175, %p176
      %s178 = ssub.s32 %s18, %s25
      %p179 = scmp.eq.s32.totalorder %s178, 0
      %s181 = sadd.s32 %s180, 1
      %s182 = scalar_select %p179, %s180, %s181
      %p185 = pneg %p179
      %p186 = scmp.eq.s32.totalorder %s18, 1
      %p187 = por %p185, %p186
      %p188 = scmp.ne.s32.totalorder %s180, %s183
      %p189 = scmp.eq.s32.totalorder %s18, 0
      %p190 = por %p188, %p189
      %p191 = scmp.ne.s32.totalorder %s180, %s183
      %p192 = scmp.eq.s32.totalorder %s23, 1
      %p193 = por %p191, %p192
      %p194 = scmp.ne.s32.totalorder %s183, %s184
      %p195 = scmp.eq.s32.totalorder %s23, 0
      %p196 = por %p194, %p195
      %p197 = scmp.ne.s32.totalorder %s183, %s184
      %p198 = scmp.eq.s32.totalorder %s24, 1
      %p199 = por %p197, %p198
      %p201 = scmp.ne.s32.totalorder %s184, %s200
      %p202 = scmp.eq.s32.totalorder %s24, 0
      %p203 = por %p201, %p202
      %p204 = scmp.le.s32.totalorder 1, %s18
      %p205 = scmp.lt.s32.totalorder %s18, 3
      %p206 = pnand %p204, %p205
      %p207 = pneg %p206
      // Predicated region
      $region9: #{tpu_custom_call.1} parent=5 // pred_check
        _
      $region10: #{tpu_custom_call.1} parent=5 // pred_check_branch
        %209 = sbr.rel (%p206) target = $region12
      $region11: #{tpu_custom_call.1} parent=5 // pred_region
        %s210 = ssub.s32 %s18, 1
        // Predicated region
        $region13: #{tpu_custom_call.1} parent=11 // pred_check
          %p211 = pneg %p65
        $region14: #{tpu_custom_call.1} parent=11 // pred_check_branch
          %213 = sbr.rel (%p211) target = $region16
        $region15: #{tpu_custom_call.1} parent=11 // pred_region
          _
        $region16: #{tpu_custom_call.1} parent=11 // pred_fallthru
          _
        // Predicated region
        $region17: #{tpu_custom_call.1} parent=11 // pred_check
          %p214 = pneg %p86
        $region18: #{tpu_custom_call.1} parent=11 // pred_check_branch
          %216 = sbr.rel (%p214) target = $region20
        $region19: #{tpu_custom_call.1} parent=11 // pred_region
          _
        $region20: #{tpu_custom_call.1} parent=11 // pred_fallthru
          _
        // Predicated region
        $region21: #{tpu_custom_call.1} parent=11 // pred_check
          %p217 = pneg %p107
        $region22: #{tpu_custom_call.1} parent=11 // pred_check_branch
          %219 = sbr.rel (%p217) target = $region24
        $region23: #{tpu_custom_call.1} parent=11 // pred_region
          _
        $region24: #{tpu_custom_call.1} parent=11 // pred_fallthru
          _
        // Predicated region
        $region25: #{tpu_custom_call.1} parent=11 // pred_check
          %p220 = pneg %p128
        $region26: #{tpu_custom_call.1} parent=11 // pred_check_branch
          %222 = sbr.rel (%p220) target = $region28
        $region27: #{tpu_custom_call.1} parent=11 // pred_region
          _
        $region28: #{tpu_custom_call.1} parent=11 // pred_fallthru
          _
        // Predicated region
        $region29: #{tpu_custom_call.1} parent=11 // pred_check
          %p223 = pneg %p149
        $region30: #{tpu_custom_call.1} parent=11 // pred_check_branch
          %225 = sbr.rel (%p223) target = $region32
        $region31: #{tpu_custom_call.1} parent=11 // pred_region
          _
        $region32: #{tpu_custom_call.1} parent=11 // pred_fallthru
          _
        // Predicated region
        $region33: #{tpu_custom_call.1} parent=11 // pred_check
          %p226 = pneg %p170
        $region34: #{tpu_custom_call.1} parent=11 // pred_check_branch
          %228 = sbr.rel (%p226) target = $region36
        $region35: #{tpu_custom_call.1} parent=11 // pred_region
          _
        $region36: #{tpu_custom_call.1} parent=11 // pred_fallthru
          _
      $region12: #{tpu_custom_call.1} parent=5 // pred_fallthru
        _
      %p229 = scmp.lt.s32.totalorder %s18, 2
      // Predicated region
      $region37: #{tpu_custom_call.1} parent=5 // pred_check
        %p230 = pneg %p229
      $region38: #{tpu_custom_call.1} parent=5 // pred_check_branch
        %232 = sbr.rel (%p230) target = $region40
      $region39: #{tpu_custom_call.1} parent=5 // pred_region
        // Predicated region
        $region41: #{tpu_custom_call.1} parent=39 // pred_check
          %p233 = pneg %p38
        $region42: #{tpu_custom_call.1} parent=39 // pred_check_branch
          %235 = sbr.rel (%p233) target = $region44
        $region43: #{tpu_custom_call.1} parent=39 // pred_region
          %s236 = sand.u32 %s28, 1
          %s237 = sand.u32 %s28, 1
          %s238 = smul.addr %s237, 8
          %s239 = scalar_lea.vmem [#allocation3], %s238
          %s240 = smul.addr %s18, 4
          %s241 = scalar_lea.vmem %s0, %s240
          // Predicated region
          $region45: #{tpu_custom_call.1} parent=43 // pred_check
            _
          $region46: #{tpu_custom_call.1} parent=43 // pred_check_branch
            %243 = sbr.rel (0) target = $region48
          $region47: #{tpu_custom_call.1} parent=43 // pred_region
            // Predicated region
            $region49: #{tpu_custom_call.1} parent=47 // pred_check
              _
            $region50: #{tpu_custom_call.1} parent=47 // pred_check_branch
              %245 = sbr.rel target = $region52
            $region51: #{tpu_custom_call.1} parent=47 // pred_region
              // Predicated region
              $region64: #{tpu_custom_call.1} parent=51 // pred_check
                _
              $region65: #{tpu_custom_call.1} parent=51 // pred_check_branch
                %262 = sbr.rel (0) target = $region67
              $region66: #{tpu_custom_call.1} parent=51 // pred_region
                loop: start=0, step=1, limit=1
                $region68: #{tpu_custom_call.1} parent=66 // loop_pre_header
                  _
                $region69: #{tpu_custom_call.1} parent=66 // loop_header
                  %s264 = sphi 0, %s268
                  %p265 = scmp.ge.s32.totalorder %s264, 1
                  %s269 = sphi %s241, %s241
                  %s270 = sphi %s239, %s239
                $region70: #{tpu_custom_call.1} parent=66 // loop_header_branch
                  %267 = sbr.rel (%p265) target = $region74
                $region71: #{tpu_custom_call.1} parent=66 // loop_body
                  _
                $region72: #{tpu_custom_call.1} parent=66 // loop_footer
                  %s268 = sadd.s32 1, %s264
                $region73: #{tpu_custom_call.1} parent=66 // loop_footer_branch
                  %263 = sbr.rel target = $region69
                $region74: #{tpu_custom_call.1} parent=66 // loop_exit
                  _
                loop: start=0, step=1, limit=1
                $region75: #{tpu_custom_call.1} parent=66 // loop_pre_header
                  _
                $region76: #{tpu_custom_call.1} parent=66 // loop_header
                  %s273 = sphi 0, %s277
                  %p274 = scmp.ge.s32.totalorder %s273, 1
                  %s278 = sphi %s241, %s241
                  %s279 = sphi %s239, %s239
                $region77: #{tpu_custom_call.1} parent=66 // loop_header_branch
                  %276 = sbr.rel (%p274) target = $region81
                $region78: #{tpu_custom_call.1} parent=66 // loop_body
                  %v280 = vld [vmem:[%s278] sm:$0xf]
                  %281 = vst [vmem:[%s279] sm:$0xf] %v280
                  %v282 = vld [vmem:[%s278 + $0x8] sm:$0xf]
                  %283 = vst [vmem:[%s279 + $0x4] sm:$0xf] %v282
                $region79: #{tpu_custom_call.1} parent=66 // loop_footer
                  %s277 = sadd.s32 1, %s273
                $region80: #{tpu_custom_call.1} parent=66 // loop_footer_branch
                  %272 = sbr.rel target = $region76
                $region81: #{tpu_custom_call.1} parent=66 // loop_exit
                  _
              $region67: #{tpu_custom_call.1} parent=51 // pred_fallthru
                _
            $region52: #{tpu_custom_call.1} parent=47 // pred_fallthru
              _
            // Predicated region
            $region53: #{tpu_custom_call.1} parent=47 // pred_check
              _
            $region54: #{tpu_custom_call.1} parent=47 // pred_check_branch
              %247 = sbr.rel (0) target = $region56
            $region55: #{tpu_custom_call.1} parent=47 // pred_region
              loop: start=0, step=1, limit=1
              $region57: #{tpu_custom_call.1} parent=55 // loop_pre_header
                _
              $region58: #{tpu_custom_call.1} parent=55 // loop_header
                %s250 = sphi 0, %s254
                %p251 = scmp.ge.s32.totalorder %s250, 1
                %s255 = sphi %s241, %s241
                %s256 = sphi %s239, %s239
              $region59: #{tpu_custom_call.1} parent=55 // loop_header_branch
                %253 = sbr.rel (%p251) target = $region63
              $region60: #{tpu_custom_call.1} parent=55 // loop_body
                %v257 = vld [vmem:[%s255] sm:$0xf]
                %258 = vst [vmem:[%s256] sm:$0xf] %v257
                %v259 = vld [vmem:[%s255 + $0x8] sm:$0xf]
                %260 = vst [vmem:[%s256 + $0x4] sm:$0xf] %v259
              $region61: #{tpu_custom_call.1} parent=55 // loop_footer
                %s254 = sadd.s32 1, %s250
              $region62: #{tpu_custom_call.1} parent=55 // loop_footer_branch
                %249 = sbr.rel target = $region58
              $region63: #{tpu_custom_call.1} parent=55 // loop_exit
                _
            $region56: #{tpu_custom_call.1} parent=47 // pred_fallthru
              _
          $region48: #{tpu_custom_call.1} parent=43 // pred_fallthru
            _
          %284 = vnop
        $region44: #{tpu_custom_call.1} parent=39 // pred_fallthru
          _
      $region40: #{tpu_custom_call.1} parent=5 // pred_fallthru
        _
      %p285 = scmp.le.s32.totalorder 1, %s18
      %p286 = scmp.lt.s32.totalorder %s18, 3
      %p287 = pnand %p285, %p286
      %p288 = pneg %p287
      // Predicated region
      $region82: #{tpu_custom_call.1} parent=5 // pred_check
        _
      $region83: #{tpu_custom_call.1} parent=5 // pred_check_branch
        %290 = sbr.rel (%p287) target = $region85
      $region84: #{tpu_custom_call.1} parent=5 // pred_region
        %s291 = ssub.s32 %s18, 1
        %s292 = sand.u32 %s31, 1
        %s293 = sand.u32 %s31, 1
        %s294 = smul.addr %s293, 8
        %s295 = scalar_lea.vmem [#allocation3], %s294
        // Predicated region
        $region86: #{tpu_custom_call.1} parent=84 // pred_check
          %p296 = pneg %p44
        $region87: #{tpu_custom_call.1} parent=84 // pred_check_branch
          %298 = sbr.rel (%p296) target = $region89
        $region88: #{tpu_custom_call.1} parent=84 // pred_region
          _
        $region89: #{tpu_custom_call.1} parent=84 // pred_fallthru
          _
        %s299 = sand.u32 %s31, 1
        %s300 = sand.u32 %s31, 1
        %s301 = smul.addr %s300, 8
        %s302 = scalar_lea.vmem [#allocation3], %s301
        %p303 = pneg %p44
        %p304 = pneg %p41
        %p305 = pneg %p65
        %p306 = pneg %p62
        %p307 = pneg %p86
        %p308 = pneg %p83
        %p309 = pneg %p107
        %p310 = pneg %p104
        %p311 = pneg %p128
        %p312 = pneg %p125
        %p313 = pneg %p149
        %p314 = pneg %p146
        %p315 = pneg %p170
        %p316 = pneg %p167
        %p317 = pneg %p196
        %p318 = pneg %p193
        %s319 = sand.u32 %s183, 1
        %s320 = scalar_lea.sflag [#allocation5], %s319
        %s321 = sand.u32 %s183, 1
        %s322 = scalar_lea.vmem [#allocation4], %s321
        %v324 = vld [vmem:[%s1] sm:$0xf]
        %v325 = vld [vmem:[%s1 + $0x4] sm:$0xf]
        %v326 = vld [vmem:[%s1 + $0x8] sm:$0xf]
        %v327 = vld [vmem:[%s1 + $0xc] sm:$0xf]
        %v328 = vld [vmem:[%s295] sm:$0xf]
        %v329 = vld [vmem:[%s295 + $0x4] sm:$0xf]
        %v330 = vld [vmem:[%s2] sm:$0xff]
        %v331 = vld [vmem:[%s2 + $0x8] sm:$0xff]
        %v332 = vld [vmem:[%s2 + $0x10] sm:$0xff]
        %v333 = vld [vmem:[%s2 + $0x18] sm:$0xff]
        %335 = vset.pattern.permute.xlu0 0
        %336 = vperm.xlu0 %335, %v330
        %v337 = vpop.permute.xlu0 %336
        %340 = vset.pattern.permute.xlu0 0
        %341 = vperm.xlu0 %340, %v331
        %v342 = vpop.permute.xlu0 %341
        %345 = vset.pattern.permute.xlu0 0
        %346 = vperm.xlu0 %345, %v332
        %v347 = vpop.permute.xlu0 %346
        %350 = vset.pattern.permute.xlu0 0
        %351 = vperm.xlu0 %350, %v333
        %v352 = vpop.permute.xlu0 %351
        %v358 = vunpack.c.l.b16 %v324
        %v359 = vunpack.c.l.b16 %v325
        %v360 = vunpack.c.l.b16 %v326
        %v361 = vunpack.c.l.b16 %v327
        %v362 = vpack.c.b16 %v359, %v358
        %v363 = vpack.c.b16 %v361, %v360
        %v366 = vunpack.c.l.b16 %v328
        %v367 = vunpack.c.l.b16 %v329
        %v368 = vpack.c.b16 %v367, %v366
        %vm370 = vcmask 130048
        %v372 = vsel %vm370, %v362, 0
        %v375 = vsel %vm370, %v363, 0
        %377 = vmatprep.subr.bf16.mxu0 0
        %378 = vmatpush1.bf16.msra.mxu0 %v368
        %379 = vmatprep.subr.bf16.mxu0 0
        %380 = vmatpush1.bf16.msra.mxu0 0
        %381 = vmatprep.subr.bf16.mxu0 0
        %382 = vmatpush1.bf16.msra.mxu0 0
        %383 = vmatprep.subr.bf16.mxu0 0
        %384 = vmatpush1.bf16.msra.mxu0 0
        %385 = vmatprep.subr.bf16.mxu0 0
        %386 = vmatpush1.bf16.msra.mxu0 0
        %387 = vmatprep.subr.bf16.mxu0 0
        %388 = vmatpush1.bf16.msra.mxu0 0
        %389 = vmatprep.subr.bf16.mxu0 0
        %390 = vmatpush1.bf16.msra.mxu0 0
        %391 = vmatprep.subr.bf16.mxu0 0
        %392 = vmatpush1.bf16.msra.mxu0 0
        %393 = vmatprep.subr.bf16.mxu0 0
        %394 = vmatpush1.bf16.msra.mxu0 0
        %395 = vmatprep.subr.bf16.mxu0 0
        %396 = vmatpush1.bf16.msra.mxu0 0
        %397 = vmatprep.subr.bf16.mxu0 0
        %398 = vmatpush1.bf16.msra.mxu0 0
        %399 = vmatprep.subr.bf16.mxu0 0
        %400 = vmatpush1.bf16.msra.mxu0 0
        %401 = vmatprep.subr.bf16.mxu0 0
        %402 = vmatpush1.bf16.msra.mxu0 0
        %403 = vmatprep.subr.bf16.mxu0 0
        %404 = vmatpush1.bf16.msra.mxu0 0
        %405 = vmatprep.subr.bf16.mxu0 0
        %406 = vmatpush1.bf16.msra.mxu0 0
        %407 = vmatprep.subr.bf16.mxu0 0
        %408 = vmatpush1.bf16.msra.mxu0 0
        %409 = vmatprep.mubr.bf16.mxu0 0
        %410 = vmatmul.mubr.bf16.gmra.mrb[0].mxu0 %v372
        %v411 = vpop.f32.mrb[0].mxu0
        %v412 = vadd.f32 %v337, %v411
        %v413 = vpop.f32.mrb[0].mxu0
        %v414 = vpop.f32.mrb[0].mxu0
        %v415 = vadd.f32 %v342, %v414
        %v416 = vpop.f32.mrb[0].mxu0
        %417 = vmatprep.mubr.bf16.mxu0 0
        %418 = vmatmul.mubr.bf16.gmra.mrb[0].mxu0 %v375
        %v419 = vpop.f32.mrb[0].mxu0
        %v420 = vadd.f32 %v347, %v419
        %v421 = vpop.f32.mrb[0].mxu0
        %v422 = vpop.f32.mrb[0].mxu0
        %v423 = vadd.f32 %v352, %v422
        %v424 = vpop.f32.mrb[0].mxu0
        %425 = vdwg.mxu0
        %v426 = vmax.f32 %v412, 0.0
        %v427 = vmax.f32 %v415, 0.0
        %v428 = vmax.f32 %v420, 0.0
        %v429 = vmax.f32 %v423, 0.0
        %v430 = vld [vmem:[%s3] sm:$0xf]
        %v431 = vld [vmem:[%s3 + $0x4] sm:$0xf]
        %v432 = vld [vmem:[%s3 + $0x8] sm:$0xf]
        %v433 = vld [vmem:[%s3 + $0xc] sm:$0xf]
        %v434 = vpack.c.bf16 %v427, %v426
        %v435 = vpack.c.bf16 %v429, %v428
        %v436 = vld [vmem:[%s4] sm:$0xff]
        %v437 = vld [vmem:[%s4 + $0x8] sm:$0xff]
        %v438 = vld [vmem:[%s4 + $0x10] sm:$0xff]
        %v439 = vld [vmem:[%s4 + $0x18] sm:$0xff]
        %441 = vset.pattern.permute.xlu0 0
        %442 = vperm.xlu0 %441, %v436
        %v443 = vpop.permute.xlu0 %442
        %446 = vset.pattern.permute.xlu0 0
        %447 = vperm.xlu0 %446, %v437
        %v448 = vpop.permute.xlu0 %447
        %451 = vset.pattern.permute.xlu0 0
        %452 = vperm.xlu0 %451, %v438
        %v453 = vpop.permute.xlu0 %452
        %456 = vset.pattern.permute.xlu0 0
        %457 = vperm.xlu0 %456, %v439
        %v458 = vpop.permute.xlu0 %457
        %v464 = vunpack.c.l.b16 %v430
        %v465 = vunpack.c.l.b16 %v431
        %v466 = vunpack.c.l.b16 %v432
        %v467 = vunpack.c.l.b16 %v433
        %v468 = vpack.c.b16 %v465, %v464
        %v469 = vpack.c.b16 %v467, %v466
        %vm470 = vcmask 261120
        %v472 = vsel %vm470, %v468, 0
        %v475 = vsel %vm470, %v469, 0
        %477 = vmatprep.subr.bf16.mxu0 0
        %478 = vmatpush1.bf16.msra.mxu0 %v434
        %479 = vmatprep.subr.bf16.mxu0 0
        %480 = vmatpush1.bf16.msra.mxu0 %v435
        %481 = vmatprep.subr.bf16.mxu0 0
        %482 = vmatpush1.bf16.msra.mxu0 0
        %483 = vmatprep.subr.bf16.mxu0 0
        %484 = vmatpush1.bf16.msra.mxu0 0
        %485 = vmatprep.subr.bf16.mxu0 0
        %486 = vmatpush1.bf16.msra.mxu0 0
        %487 = vmatprep.subr.bf16.mxu0 0
        %488 = vmatpush1.bf16.msra.mxu0 0
        %489 = vmatprep.subr.bf16.mxu0 0
        %490 = vmatpush1.bf16.msra.mxu0 0
        %491 = vmatprep.subr.bf16.mxu0 0
        %492 = vmatpush1.bf16.msra.mxu0 0
        %493 = vmatprep.subr.bf16.mxu0 0
        %494 = vmatpush1.bf16.msra.mxu0 0
        %495 = vmatprep.subr.bf16.mxu0 0
        %496 = vmatpush1.bf16.msra.mxu0 0
        %497 = vmatprep.subr.bf16.mxu0 0
        %498 = vmatpush1.bf16.msra.mxu0 0
        %499 = vmatprep.subr.bf16.mxu0 0
        %500 = vmatpush1.bf16.msra.mxu0 0
        %501 = vmatprep.subr.bf16.mxu0 0
        %502 = vmatpush1.bf16.msra.mxu0 0
        %503 = vmatprep.subr.bf16.mxu0 0
        %504 = vmatpush1.bf16.msra.mxu0 0
        %505 = vmatprep.subr.bf16.mxu0 0
        %506 = vmatpush1.bf16.msra.mxu0 0
        %507 = vmatprep.subr.bf16.mxu0 0
        %508 = vmatpush1.bf16.msra.mxu0 0
        %509 = vmatprep.mubr.bf16.mxu0 0
        %510 = vmatmul.mubr.bf16.gmra.mrb[0].mxu0 %v472
        %v511 = vpop.f32.mrb[0].mxu0
        %v512 = vadd.f32 %v443, %v511
        %v513 = vpop.f32.mrb[0].mxu0
        %v514 = vpop.f32.mrb[0].mxu0
        %v515 = vadd.f32 %v448, %v514
        %v516 = vpop.f32.mrb[0].mxu0
        %517 = vmatprep.mubr.bf16.mxu0 0
        %518 = vmatmul.mubr.bf16.gmra.mrb[0].mxu0 %v475
        %v519 = vpop.f32.mrb[0].mxu0
        %v520 = vadd.f32 %v453, %v519
        %v521 = vpop.f32.mrb[0].mxu0
        %v522 = vpop.f32.mrb[0].mxu0
        %v523 = vadd.f32 %v458, %v522
        %v524 = vpop.f32.mrb[0].mxu0
        %525 = vdwg.mxu0
        %v526 = vmax.f32 %v512, 0.0
        %v527 = vmax.f32 %v515, 0.0
        %v528 = vmax.f32 %v520, 0.0
        %v529 = vmax.f32 %v523, 0.0
        %v530 = vld [vmem:[%s5] sm:$0xff]
        %v531 = vld [vmem:[%s5 + $0x8] sm:$0xff]
        %v532 = vld [vmem:[%s5 + $0x10] sm:$0xff]
        %v533 = vld [vmem:[%s5 + $0x18] sm:$0xff]
        %535 = vset.pattern.permute.xlu0 0
        %536 = vperm.xlu0 %535, %v530
        %v537 = vpop.permute.xlu0 %536
        %540 = vset.pattern.permute.xlu0 0
        %541 = vperm.xlu0 %540, %v531
        %v542 = vpop.permute.xlu0 %541
        %545 = vset.pattern.permute.xlu0 0
        %546 = vperm.xlu0 %545, %v532
        %v547 = vpop.permute.xlu0 %546
        %550 = vset.pattern.permute.xlu0 0
        %551 = vperm.xlu0 %550, %v533
        %v552 = vpop.permute.xlu0 %551
        %v554 = vmul.f32 %v537, %v526
        %v555 = vmul.f32 %v542, %v527
        %v556 = vmul.f32 %v547, %v528
        %v557 = vmul.f32 %v552, %v529
        %v558 = vadd.f32 %v554, %v555
        %v559 = vadd.f32 %v558, %v556
        %v560 = vadd.f32 %v559, %v557
        %v561 = vrot.slane %v560, 4
        %v562 = vadd.f32 %v560, %v561
        %v563 = vrot.slane %v562, 2
        %v564 = vadd.f32 %v562, %v563
        %v565 = vrot.slane %v564, 1
        %v566 = vadd.f32 %v564, %v565
        %v567 = vld [vmem:[#allocation2] sm:$0x1]
        %569 = vset.pattern.permute.xlu0 0
        %570 = vperm.xlu0 %569, %v567
        %v571 = vpop.permute.xlu0 %570
        %v573 = vlaneseq
        %v574 = vshrl.u32 %v573, 7
        %v575 = vsub.s32 0, %v574
        %v576 = vrot.slane %v571, %v575
        %v577 = vadd.f32 %v566, %v576
        %578 = vst [vmem:[%s322] sm:$0x1] %v577
        %s579 = sand.u32 %s183, 1
        %s580 = scalar_lea.sflag [#allocation5], %s579
        %s581 = sand.u32 %s183, 1
        %s582 = scalar_lea.vmem [#allocation4], %s581
        // Predicated region
        $region90: #{tpu_custom_call.1} parent=84 // pred_check
          %p583 = pneg %p193
        $region91: #{tpu_custom_call.1} parent=84 // pred_check_branch
          %585 = sbr.rel (%p583) target = $region93
        $region92: #{tpu_custom_call.1} parent=84 // pred_region
          %s587 = ssub.s32 16, 16
          %588 = vsyncadd %s580, %s587
          %s589 = smul.addr %s23, 16
          %s590 = scalar_lea.hbm %s7, %s589
          %s592 = sshll.u32 %s582, 4
          %s593 = int_to_ptr.vmem [resolvable:$true] %s592
          %595 = dma.vmem_to_hbm [thread:$0]  %s593, 16, %s590, %s580
        $region93: #{tpu_custom_call.1} parent=84 // pred_fallthru
          _
      $region85: #{tpu_custom_call.1} parent=5 // pred_fallthru
        _
      %p596 = scmp.le.s32.totalorder 2, %s18
      // Predicated region
      $region94: #{tpu_custom_call.1} parent=5 // pred_check
        %p597 = pneg %p596
      $region95: #{tpu_custom_call.1} parent=5 // pred_check_branch
        %599 = sbr.rel (%p597) target = $region97
      $region96: #{tpu_custom_call.1} parent=5 // pred_region
        %s600 = ssub.s32 %s18, 2
        // Predicated region
        $region98: #{tpu_custom_call.1} parent=96 // pred_check
          %p601 = pneg %p199
        $region99: #{tpu_custom_call.1} parent=96 // pred_check_branch
          %603 = sbr.rel (%p601) target = $region101
        $region100: #{tpu_custom_call.1} parent=96 // pred_region
          %s604 = sand.u32 %s184, 1
          %s605 = scalar_lea.sflag [#allocation5], %s604
          %s606 = sand.u32 %s184, 1
          %s607 = scalar_lea.vmem [#allocation4], %s606
          %608 = dma.done %s605, 16
        $region101: #{tpu_custom_call.1} parent=96 // pred_fallthru
          _
      $region97: #{tpu_custom_call.1} parent=5 // pred_fallthru
        _
    $region6: #{tpu_custom_call.1} parent=1 // loop_footer
      %s22 = sadd.s32 1, %s18
    $region7: #{tpu_custom_call.1} parent=1 // loop_footer_branch
      %17 = sbr.rel target = $region3
    $region8: #{tpu_custom_call.1} parent=1 // loop_exit
      _
    %609 = vsyncpa [#allocation5], 1
    %s610 = scalar_lea.sflag [#allocation5], 1
    %611 = vsyncpa %s610, 1

</llo_original>
